<compile_context>
chip_gen: v6e
topology: v6e:2x2x1
jax: 0.10.0
libtpu: 0.0.40
codegen_flags: <defaults>
</compile_context>

<pallas_src>
import functools

import jax
import jax.numpy as jnp
from jax.experimental import pallas as pl
from jax.experimental.pallas import tpu as pltpu

# 3x3 tap offsets (dh, dw), row-major.  Tap t corresponds to PyTorch kernel
# position (kh, kw) = (dh + 1, dw + 1).  To load real PyTorch OIHW Conv2d
# weights, convert with: w9 = weight.permute(2, 3, 1, 0).reshape(9, Cin, Cout).
TAPS = ((-1, -1), (-1, 0), (-1, 1),
        (0, -1), (0, 0), (0, 1),
        (1, -1), (1, 0), (1, 1))


def make_fused_kernel(H, W, C, NB, roll_matches_jnp=True):
    """Fused forward kernel on a channel-major (C*NB, H*W) tile.

    Row r = c*NB + n holds channel c of image n; lanes are the flattened
    (h, w) plane.  A conv tap (dh, dw) is a cyclic lane roll plus row/column
    validity masks; channel mixing is expressed as C partial sums (one per
    channel shift d, using pre-shifted weight columns) that are combined with
    C-1 sublane rolls at the end.
    """
    HW = H * W
    R = C * NB

    def rollv(v, shift, axis, size):
        # "shift" is always given in jnp.roll convention: out[i] = v[i - shift].
        s = shift % size
        if not roll_matches_jnp:          # convention guard (see probe in main)
            s = (size - s) % size
        if s == 0:
            return v
        return pltpu.roll(v, s, axis)

    def kernel(x_ref, m_ref, wv_ref, bv_ref, o_ref):
        # x_ref, m_ref, o_ref: (R, HW) f32 VMEM
        # wv_ref: (R, 3*9*C) f32 VMEM; column (k*9 + t)*C + d holds the weight
        #         vector w_k[t, ci, (ci - d) % C] at rows ci*NB + n
        # bv_ref: (R, 3) f32 VMEM; column k holds b_k[co] at rows co*NB + n
        x = x_ref[...]
        m = m_ref[...]
        xm = x * m                               # x * mask (mask pre-broadcast)

        # Validity masks (identical for every sublane row).
        pos = jax.lax.broadcasted_iota(jnp.int32, (1, HW), 1)
        col = pos % W
        row = pos // W
        m_left = col >= 1                        # tap reads (h+dh, w-1)
        m_right = col <= W - 2                   # tap reads (h+dh, w+1)
        m_up = row >= 1                          # tap reads (h-1, w+dw)
        m_down = row <= H - 2                    # tap reads (h+1, w+dw)

        def tap_planes(v):
            """Yield the 9 shifted+masked planes of v in TAPS order.

            3 row-shifted planes are built once (rolls by +-W lanes) and reused
            for the 3 horizontal offsets; out-of-image reads are zeroed.
            """
            for dh in (-1, 0, 1):
                if dh == 0:
                    base = v
                elif dh == -1:
                    base = jnp.where(m_up, rollv(v, W, 1, HW), 0.0)
                else:
                    base = jnp.where(m_down, rollv(v, HW - W, 1, HW), 0.0)
                yield jnp.where(m_left, rollv(base, 1, 1, HW), 0.0)       # dw=-1
                yield base                                                # dw= 0
                yield jnp.where(m_right, rollv(base, HW - 1, 1, HW), 0.0)  # dw=+1

        def conv_group(v, ks):
            """3x3 same-padding convs (weight slots `ks`) sharing input v."""
            parts = [[None for _ in range(C)] for _ in ks]   # per conv, per d
            for t, p in enumerate(tap_planes(v)):
                for d in range(C):
                    for a, k in enumerate(ks):
                        c0 = (k * 9 + t) * C + d
                        contrib = p * wv_ref[:, c0:c0 + 1]    # (R,HW)*(R,1)
                        parts[a][d] = contrib if parts[a][d] is None \
                            else parts[a][d] + contrib
            outs = []
            for a, k in enumerate(ks):
                acc = parts[a][0]
                for d in range(1, C):
                    # undo the channel pre-shift: one sublane roll per d
                    acc = acc + rollv(parts[a][d], (C - d) * NB, 0, R)
                outs.append(acc + bv_ref[:, k:k + 1])
            return outs

        x1, x3 = conv_group(xm, (0, 2))     # stage1 & resbranch share xm planes
        # x1.clone().detach() is autograd-only -> identity in the forward pass.
        (x2,) = conv_group(x1 * m, (1,))
        o_ref[...] = jnp.tanh(x2 + x3).astype(o_ref.dtype)   # fused EUP epilogue

    return kernel


def _detect_roll_convention():
    """One-time tiny probe: does pltpu.roll follow jnp.roll on this backend
    (elements move to higher indices for positive shift)?  Used to pin the
    tap-shift signs regardless of the rotate convention."""
    def probe(x_ref, o_ref):
        o_ref[...] = pltpu.roll(x_ref[...], 1, axis=1)

    x = jnp.broadcast_to(jnp.arange(128, dtype=jnp.float32)[None, :], (8, 128))
    y = pl.pallas_call(
        probe, out_shape=jax.ShapeDtypeStruct((8, 128), jnp.float32))(x)
    return bool(float(y[0, 1]) == 0.0)      # jnp.roll: out[:,1] == x[:,0] == 0


def pack_params(params, n_batch):
    """Pack conv weights/biases ONCE into the kernel's VMEM tables.

    params["w{1,2,3}"]: (9, Cin, Cout) in TAPS order (from PyTorch OIHW use
    weight.permute(2,3,1,0).reshape(9,Cin,Cout)); params["b{1,2,3}"]: (Cout,).

    Returns:
      wv: (C*NB, 3*9*C)  column (k*9+t)*C+d = w_k[t, ci, (ci-d)%C] at rows ci*NB+n
      bv: (C*NB, 3)      column k           = b_k[co]              at rows co*NB+n
    """
    NB = n_batch
    C = params["w1"].shape[-1]
    ws = [params["w1"], params["w2"], params["w3"]]
    bs = [params["b1"], params["b2"], params["b3"]]
    ci = jnp.arange(C)
    cols = []
    for w in ws:
        for t in range(9):
            for d in range(C):
                colvals = w[t, ci, (ci - d) % C]              # (C,)
                cols.append(jnp.repeat(colvals, NB))          # (C*NB,)
    wv = jnp.stack(cols, axis=1).astype(jnp.float32)          # (C*NB, 3*9*C)
    bv = jnp.stack([jnp.repeat(b, NB) for b in bs],
                   axis=1).astype(jnp.float32)                # (C*NB, 3)
    return wv, bv


def model_forward(x, mask, wv, bv, *, roll_matches_jnp=True):
    """x: (N, C, H, W), mask: (N, 1, H, W) -> (N, C, H, W), float32.

    The whole batch is processed in one gridless pallas_call on a channel-major
    (C*N, H*W) tile (8 x 256 = ~8 KB for the demo shape), so no batch chunking
    or grid pipelining is needed at this size.
    """
    N, C, H, W = x.shape
    HW = H * W
    R = C * N
    assert H >= 2 and W >= 2, "3x3 'same' conv path needs H, W >= 2"
    assert HW % 128 == 0, "H*W should be a multiple of 128 for lane-dense tiles"
    assert wv.shape == (R, 3 * 9 * C) and bv.shape == (R, 3), \
        "weights must be packed with pack_params(params, n_batch=N)"

    # Channel-major packing: row = c*N + n (makes channel mixing a sublane roll).
    x_packed = jnp.transpose(x, (1, 0, 2, 3)).reshape(R, HW).astype(jnp.float32)
    m_packed = jnp.broadcast_to(mask.reshape(1, N, HW).astype(jnp.float32),
                                (C, N, HW)).reshape(R, HW)

    out_packed = pl.pallas_call(
        make_fused_kernel(H, W, C, N, roll_matches_jnp),
        out_shape=jax.ShapeDtypeStruct((R, HW), jnp.float32),
        in_specs=[pl.BlockSpec(memory_space=pltpu.MemorySpace.VMEM)] * 4,
        out_specs=pl.BlockSpec(memory_space=pltpu.MemorySpace.VMEM),
    )(x_packed, m_packed, wv, bv)

    return jnp.transpose(out_packed.reshape(C, N, H, W), (1, 0, 2, 3))


# --------------------------------------------------------------------------
# Deterministic synthetic parameters.  Weight layout: (9, Cin, Cout) in TAPS
# order; bias: (Cout,).
# --------------------------------------------------------------------------
def init_params(key, C):
    ks = jax.random.split(key, 6)
    def w(k): return 0.1 * jax.random.normal(k, (9, C, C), jnp.float32)
    def b(k): return 0.05 * jax.random.normal(k, (C,), jnp.float32)
    return {"w1": w(ks[0]), "b1": b(ks[1]),
            "w2": w(ks[2]), "b2": b(ks[3]),
            "w3": w(ks[4]), "b3": b(ks[5])}


# --------------------------------------------------------------------------
# Pure-JAX reference (spatial-domain pad + shift) used as a correctness check.
# --------------------------------------------------------------------------
def reference_forward(x, mask, params):
    def conv3x3_ref(inp, w9, b):
        N, C, H, W = inp.shape
        xp = jnp.pad(inp, ((0, 0), (0, 0), (1, 1), (1, 1)))
        out = jnp.zeros((N, w9.shape[2], H, W), jnp.float32)
        for t, (dh, dw) in enumerate(TAPS):
            patch = xp[:, :, 1 + dh:1 + dh + H, 1 + dw:1 + dw + W]
            out = out + jnp.einsum("nchw,cd->ndhw", patch, w9[t],
                                   precision=jax.lax.Precision.HIGHEST)
        return out + b[None, :, None, None]

    xm = x * mask
    x1 = jax.lax.stop_gradient(conv3x3_ref(xm, params["w1"], params["b1"]))
    x2 = conv3x3_ref(x1 * mask, params["w2"], params["b2"])
    x3 = conv3x3_ref(xm, params["w3"], params["b3"])
    return jnp.tanh(x2 + x3)


if __name__ == "__main__":
    N, C, H, W = 2, 4, 16, 16
    key = jax.random.PRNGKey(0)
    kx, km, kp = jax.random.split(key, 3)

    x = jax.random.normal(kx, (N, C, H, W), jnp.float32)
    mask = (jax.random.uniform(km, (N, 1, H, W)) > 0.3).astype(jnp.float32)
    params = init_params(kp, C)

    wv, bv = pack_params(params, N)                 # packed once, outside jit
    roll_ok = _detect_roll_convention()             # one-time convention probe

    fwd = jax.jit(functools.partial(model_forward, roll_matches_jnp=roll_ok))
    out = fwd(x, mask, wv, bv)
    jax.block_until_ready(out)

    assert out.shape == (N, C, H, W)
    assert out.dtype == jnp.float32

    ref = reference_forward(x, mask, params)
    err = float(jnp.max(jnp.abs(out - ref)))
    assert err < 1e-4, f"max abs error vs reference: {err}"

    print("KERNEL_OK")
</pallas_src>

<mosaic_0001>
module attributes {stable_mosaic.version = 11 : i64} {
  func.func @probe(%arg0: memref<8x128xf32, #tpu.memory_space<vmem>>, %arg1: memref<8x128xf32, #tpu.memory_space<vmem>>) attributes {dimension_semantics = [], scalar_prefetch = 0 : i64, scratch_operands = 0 : i64, tpu.core_type = #tpu.core_type<tc>} {
    %c0 = arith.constant 0 : index
    %c0_0 = arith.constant 0 : index
    %0 = vector.load %arg0[%c0, %c0_0] : memref<8x128xf32, #tpu.memory_space<vmem>>, vector<8x128xf32>
    %c1_i32 = arith.constant 1 : i32
    %1 = tpu.dynamic_rotate %0 by %c1_i32 dim 1 : vector<8x128xf32>, i32 -> vector<8x128xf32>
    %c0_1 = arith.constant 0 : index
    %c0_2 = arith.constant 0 : index
    %2 = vector.load %arg1[%c0_1, %c0_2] : memref<8x128xf32, #tpu.memory_space<vmem>>, vector<8x128xf32>
    tpu.vector_store %arg1[%c0_1, %c0_2], %1 {strides = array<i32>} : memref<8x128xf32, #tpu.memory_space<vmem>>, vector<8x128xf32>,
    return
  }
}

</mosaic_0001>

<llo_original>
// kernel: tpu_custom_call.1
$region0: #{tpu_custom_call.1}
  #allocation0 [shape = 'u32[]', space=smem, size = 0x4, offset = 0x4, fixed_abs, tag = 'smem constant byte address 0x4 - core index']
  #allocation1 [shape = 'u32[144,128]{1,0:T(1,128)}', space=vmem, size = 0x12000, scoped, tag = 'internal scratch']
  %s0 = inlined_call_operand.hbm [shape: f32[8,128], index: 0, kind: input, shape index: {}]
  %s1 = inlined_call_operand.hbm [shape: f32[8,128], index: 1, kind: output, shape index: {}]
  %s2 = sld [smem:[#allocation0]]
  $region18: #{tpu_custom_call.1} parent=0
    _
  %s4 = ssub.s32 1, %s2
  %s5 = scalar_select 0, %s4, %s2
  $region1: #{tpu_custom_call.1} parent=0
    #allocation2 [shape = 'u8[4096]{0}', space=vmem, size = 0x1000, scoped, tag = 'input window, operand 0, single buffered']
    #allocation3 [shape = 's32[1]{0}', space=sflag, size = 0x4, scoped, tag = 'scoped memory for tpu_custom_call.1']
    #allocation4 [shape = 's32[1]{0}', space=sflag, size = 0x4, scoped, tag = 'scoped memory for tpu_custom_call.1']
    #allocation5 [shape = 'u8[4096]{0}', space=vmem, size = 0x1000, scoped, tag = 'output window, operand 0, single buffered']
    %6 = vsyncpa [#allocation3], 0
    %7 = vsyncpa [#allocation4], 0
    // Predicated region
    $region2: #{tpu_custom_call.1} parent=1 // pred_check
      _
    $region3: #{tpu_custom_call.1} parent=1 // pred_check_branch
      %9 = sbr.rel (0) target = $region5
    $region4: #{tpu_custom_call.1} parent=1 // pred_region
      %s11 = ssub.s32 128, 128
      %12 = vsyncadd [#allocation3], %s11
      %s14 = sshll.u32 [#allocation2], 4
      %s15 = int_to_ptr.vmem [resolvable:$true] %s14
      %17 = dma.hbm_to_vmem [thread:$0]  %s0, 128, %s15, [#allocation3]
    $region5: #{tpu_custom_call.1} parent=1 // pred_fallthru
      _
    // Predicated region
    $region6: #{tpu_custom_call.1} parent=1 // pred_check
      _
    $region7: #{tpu_custom_call.1} parent=1 // pred_check_branch
      %19 = sbr.rel (0) target = $region9
    $region8: #{tpu_custom_call.1} parent=1 // pred_region
      %20 = dma.done [#allocation3], 128
    $region9: #{tpu_custom_call.1} parent=1 // pred_fallthru
      _
    %v21 = vld [vmem:[#allocation2] sm:$0xff]
    %22 = vrot.lane.b32.xlu0 %v21, 1
    %v23 = vpop.permute.xlu0 %22
    %24 = vst [vmem:[#allocation5] sm:$0xff] %v23
    // Predicated region
    $region10: #{tpu_custom_call.1} parent=1 // pred_check
      _
    $region11: #{tpu_custom_call.1} parent=1 // pred_check_branch
      %26 = sbr.rel (0) target = $region13
    $region12: #{tpu_custom_call.1} parent=1 // pred_region
      %s28 = ssub.s32 128, 128
      %29 = vsyncadd [#allocation4], %s28
      %s31 = sshll.u32 [#allocation5], 4
      %s32 = int_to_ptr.vmem [resolvable:$true] %s31
      %34 = dma.vmem_to_hbm [thread:$0]  %s32, 128, %s1, [#allocation4]
    $region13: #{tpu_custom_call.1} parent=1 // pred_fallthru
      _
    // Predicated region
    $region14: #{tpu_custom_call.1} parent=1 // pred_check
      _
    $region15: #{tpu_custom_call.1} parent=1 // pred_check_branch
      %36 = sbr.rel (0) target = $region17
    $region16: #{tpu_custom_call.1} parent=1 // pred_region
      %37 = dma.done [#allocation4], 128
    $region17: #{tpu_custom_call.1} parent=1 // pred_fallthru
      _
    %38 = vsyncpa [#allocation3], 1
    %39 = vsyncpa [#allocation4], 1

</llo_original>
